<compile_context>
chip_gen: v7x
topology: tpu7x:2x2x1
jax: 0.10.0
libtpu: 0.0.40
codegen_flags: <defaults>
</compile_context>

<pallas_src>
import functools

import jax
import jax.numpy as jnp
from jax.experimental import pallas as pl
from jax.experimental.pallas import tpu as pltpu

_MiB = 1 << 20


# ----------------------------------------------------------------------------
# Sizing helpers
# ----------------------------------------------------------------------------
def _round_up(x, m):
    return ((x + m - 1) // m) * m


def _round_down(x, m):
    return (x // m) * m


def _sublane(dtype):
    # sublane tile minimum: 8 rows for 4-byte, 16 for 2-byte, 32 for 1-byte.
    return {4: 8, 2: 16, 1: 32}.get(jnp.dtype(dtype).itemsize, 8)


def _vmem_params():
    """Generation-aware (pipelined-buffer budget, scoped vmem_limit ceiling)."""
    try:
        info = pltpu.get_tpu_info()
        phys = int(getattr(info, "vmem_capacity_bytes", 128 * _MiB))
    except Exception:
        phys = 128 * _MiB
    # Leave ~16 MiB of physical VMEM for compiler internals (critical on v7x's
    # 64 MiB per-TC VMEM); our own buffers target a bit less than that again.
    ceiling = max(phys - 16 * _MiB, 32 * _MiB)
    budget = max((ceiling - 6 * _MiB) * 8 // 9, 8 * _MiB)
    return budget, ceiling


def _num_tensorcores():
    """TensorCores per chip (2 on v7x/v4-class); used to keep >=1 tile/core."""
    try:
        kind = jax.devices()[0].device_kind.lower()
    except Exception:
        return 1
    return 2 if ("7" in kind or "v4" in kind or "v3" in kind) else 1


def _choose_token_tile(n_tokens, requested, sublane, budget, bytes_per_row, num_tc):
    """Largest sublane-multiple tile that fits the budget, <= requested, and
    leaves at least one token tile per TensorCore."""
    max_fit = max(int(budget // max(bytes_per_row, 1)), 1)
    per_core = _round_up(max(pl.cdiv(n_tokens, max(num_tc, 1)), 1), sublane)
    tt = min(max(requested, sublane), max_fit, per_core)
    return max(_round_down(tt, sublane), sublane)


def _vmem_limit(footprint, ceiling):
    return int(min(max(footprint * 9 // 8 + 6 * _MiB, 32 * _MiB), ceiling))


# ----------------------------------------------------------------------------
# Kernels
# ----------------------------------------------------------------------------
def _sum_collapsed_kernel(x_ref, out_ref, *, num_ranks):
    # x_ref: (R, tt, H)  out_ref: (tt, H)
    acc = x_ref[0].astype(jnp.float32)
    for k in range(1, num_ranks):
        acc = acc + x_ref[k].astype(jnp.float32)
    out_ref[...] = acc.astype(out_ref.dtype)


def _sum_inplace_kernel(x_ref, out_ref, *, num_ranks):
    # f32 I/O: accumulate directly into the (rank-resident) output block.
    # x_ref: (tt, H)  out_ref: (tt, H)
    if num_ranks == 1:
        out_ref[...] = x_ref[...]
        return
    r = pl.program_id(1)

    @pl.when(r == 0)
    def _():
        out_ref[...] = x_ref[...]

    @pl.when(r > 0)
    def _():
        out_ref[...] += x_ref[...]


def _sum_acc_kernel(x_ref, out_ref, acc_ref, *, num_ranks):
    # bf16/fp16 I/O: f32 scratch accumulator; init from rank 0, last rank fused.
    x = x_ref[...].astype(jnp.float32)
    if num_ranks == 1:
        out_ref[...] = x.astype(out_ref.dtype)
        return
    r = pl.program_id(1)

    @pl.when(r == 0)
    def _():
        acc_ref[...] = x

    @pl.when(jnp.logical_and(r > 0, r < num_ranks - 1))
    def _():
        acc_ref[...] += x

    @pl.when(r == num_ranks - 1)
    def _():
        out_ref[...] = (acc_ref[...] + x).astype(out_ref.dtype)


def _rmsnorm_finalize(resid, w_ref, out_ref, res_out_ref, eps, inv_hidden):
    var = jnp.sum(resid * resid, axis=-1, keepdims=True) * inv_hidden
    inv = jax.lax.rsqrt(var + eps)
    out_ref[...] = (resid * inv * w_ref[...].astype(jnp.float32)).astype(out_ref.dtype)
    res_out_ref[...] = resid.astype(res_out_ref.dtype)


def _rmsnorm_collapsed_kernel(x_ref, res_ref, w_ref, out_ref, res_out_ref, *,
                              eps, inv_hidden, num_ranks):
    # x_ref: (R, tt, H)  res_ref: (tt, H)  w_ref: (1, H)
    acc = res_ref[...].astype(jnp.float32) + x_ref[0].astype(jnp.float32)
    for k in range(1, num_ranks):
        acc = acc + x_ref[k].astype(jnp.float32)
    _rmsnorm_finalize(acc, w_ref, out_ref, res_out_ref, eps, inv_hidden)


def _rmsnorm_acc_kernel(x_ref, res_ref, w_ref, out_ref, res_out_ref, acc_ref, *,
                        eps, inv_hidden, num_ranks):
    # Per-rank streaming variant.  Accumulator init is fused with the residual
    # add and rank 0's shard; the last rank's add is fused into the epilogue.
    x = x_ref[...].astype(jnp.float32)
    if num_ranks == 1:
        resid = res_ref[...].astype(jnp.float32) + x
        _rmsnorm_finalize(resid, w_ref, out_ref, res_out_ref, eps, inv_hidden)
        return
    r = pl.program_id(1)

    @pl.when(r == 0)
    def _():
        acc_ref[...] = res_ref[...].astype(jnp.float32) + x

    @pl.when(jnp.logical_and(r > 0, r < num_ranks - 1))
    def _():
        acc_ref[...] += x

    @pl.when(r == num_ranks - 1)
    def _():
        resid = acc_ref[...] + x
        _rmsnorm_finalize(resid, w_ref, out_ref, res_out_ref, eps, inv_hidden)


# ----------------------------------------------------------------------------
# Wrappers
# ----------------------------------------------------------------------------
def _x_spec_perrank(tt, h, block_bytes):
    # Small per-rank blocks (<= 1 MiB): compute per step is negligible, so keep
    # an extra input copy in flight to hide DMA issue latency.
    if block_bytes <= _MiB:
        return pl.BlockSpec((None, tt, h), lambda i, k: (k, i, 0),
                            pipeline_mode=pl.Buffered(3))
    return pl.BlockSpec((None, tt, h), lambda i, k: (k, i, 0))


@functools.partial(jax.jit, static_argnames=("token_tile",))
def allreduce_none(x, *, token_tile=512):
    """fusion_op == NONE.  x: [tp, tokens, hidden] -> [tokens, hidden]."""
    num_ranks, n, h = x.shape
    dtype = x.dtype
    ib = jnp.dtype(dtype).itemsize
    sub = _sublane(dtype)
    budget, ceiling = _vmem_params()
    num_tc = _num_tensorcores()

    # Rank-collapsed variant: full (R, tt, H) block per step, no accumulator.
    bpr_collapsed = 2 * h * ib * (num_ranks + 1)
    tt_collapsed = _choose_token_tile(n, token_tile, sub, budget, bpr_collapsed, num_tc)

    # Per-rank streaming variant: x + out double-buffered (+ f32 acc if needed).
    acc_in_out = dtype == jnp.float32
    bpr_perrank = 2 * h * ib * 2 + (0 if acc_in_out else 4 * h)
    tt_perrank = _choose_token_tile(n, token_tile, sub, budget, bpr_perrank, num_tc)

    if num_ranks <= 4 and 2 * tt_collapsed >= tt_perrank:
        tt = tt_collapsed
        footprint = tt * bpr_collapsed
        return pl.pallas_call(
            functools.partial(_sum_collapsed_kernel, num_ranks=num_ranks),
            out_shape=jax.ShapeDtypeStruct((n, h), dtype),
            grid_spec=pltpu.PrefetchScalarGridSpec(
                num_scalar_prefetch=0,
                grid=(pl.cdiv(n, tt),),
                in_specs=[pl.BlockSpec((num_ranks, tt, h), lambda i: (0, i, 0))],
                out_specs=pl.BlockSpec((tt, h), lambda i: (i, 0)),
            ),
            compiler_params=pltpu.CompilerParams(
                dimension_semantics=("parallel",),
                vmem_limit_bytes=_vmem_limit(footprint, ceiling)),
        )(x)

    # Per-rank streaming: rank axis is the trailing "arbitrary" reduction axis.
    tt = tt_perrank
    footprint = tt * bpr_perrank
    x_spec = _x_spec_perrank(tt, h, tt * h * ib)
    if acc_in_out:
        kernel = functools.partial(_sum_inplace_kernel, num_ranks=num_ranks)
        scratch = []
    else:
        kernel = functools.partial(_sum_acc_kernel, num_ranks=num_ranks)
        scratch = [pltpu.VMEM((tt, h), jnp.float32)]
    return pl.pallas_call(
        kernel,
        out_shape=jax.ShapeDtypeStruct((n, h), dtype),
        grid_spec=pltpu.PrefetchScalarGridSpec(
            num_scalar_prefetch=0,
            grid=(pl.cdiv(n, tt), num_ranks),
            in_specs=[x_spec],
            out_specs=pl.BlockSpec((tt, h), lambda i, k: (i, 0)),
            scratch_shapes=scratch,
        ),
        compiler_params=pltpu.CompilerParams(
            dimension_semantics=("parallel", "arbitrary"),
            vmem_limit_bytes=_vmem_limit(footprint, ceiling)),
    )(x)


@functools.partial(jax.jit, static_argnames=("eps", "token_tile"))
def allreduce_residual_rmsnorm(x, residual, norm_weight, eps, *, token_tile=512):
    """fusion_op == RESIDUAL_RMS_NORM.

    x: [tp, tokens, hidden], residual: [tokens, hidden], norm_weight: [hidden]
    returns (norm_out [tokens, hidden], residual_out [tokens, hidden])
    """
    num_ranks, n, h = x.shape
    dtype = x.dtype
    ib = jnp.dtype(dtype).itemsize
    sub = _sublane(dtype)
    budget, ceiling = _vmem_params()
    num_tc = _num_tensorcores()
    w2d = norm_weight.reshape(1, h)

    out_shapes = (jax.ShapeDtypeStruct((n, h), dtype),
                  jax.ShapeDtypeStruct((n, h), dtype))

    # Rank-collapsed variant: x block (R, tt, H) + residual + 2 outputs.
    bpr_collapsed = 2 * h * ib * (num_ranks + 3)
    tt_collapsed = _choose_token_tile(n, token_tile, sub, budget, bpr_collapsed, num_tc)

    # Per-rank streaming variant: 2 inputs + 2 outputs double-buffered + f32 acc.
    bpr_perrank = 2 * h * ib * 4 + 4 * h
    tt_perrank = _choose_token_tile(n, token_tile, sub, budget, bpr_perrank, num_tc)

    if num_ranks <= 4 and 2 * tt_collapsed >= tt_perrank:
        tt = tt_collapsed
        footprint = tt * bpr_collapsed
        kernel = functools.partial(_rmsnorm_collapsed_kernel, eps=float(eps),
                                   inv_hidden=1.0 / h, num_ranks=num_ranks)
        return pl.pallas_call(
            kernel,
            out_shape=out_shapes,
            grid_spec=pltpu.PrefetchScalarGridSpec(
                num_scalar_prefetch=0,
                grid=(pl.cdiv(n, tt),),
                in_specs=[
                    pl.BlockSpec((num_ranks, tt, h), lambda i: (0, i, 0)),
                    pl.BlockSpec((tt, h), lambda i: (i, 0)),
                    pl.BlockSpec((1, h), lambda i: (0, 0)),
                ],
                out_specs=[
                    pl.BlockSpec((tt, h), lambda i: (i, 0)),
                    pl.BlockSpec((tt, h), lambda i: (i, 0)),
                ],
            ),
            compiler_params=pltpu.CompilerParams(
                dimension_semantics=("parallel",),
                vmem_limit_bytes=_vmem_limit(footprint, ceiling)),
        )(x, residual, w2d)

    tt = tt_perrank
    footprint = tt * bpr_perrank
    kernel = functools.partial(_rmsnorm_acc_kernel, eps=float(eps),
                               inv_hidden=1.0 / h, num_ranks=num_ranks)
    return pl.pallas_call(
        kernel,
        out_shape=out_shapes,
        grid_spec=pltpu.PrefetchScalarGridSpec(
            num_scalar_prefetch=0,
            grid=(pl.cdiv(n, tt), num_ranks),
            in_specs=[
                _x_spec_perrank(tt, h, tt * h * ib),
                pl.BlockSpec((tt, h), lambda i, k: (i, 0)),
                pl.BlockSpec((1, h), lambda i, k: (0, 0)),
            ],
            out_specs=[
                pl.BlockSpec((tt, h), lambda i, k: (i, 0)),
                pl.BlockSpec((tt, h), lambda i, k: (i, 0)),
            ],
            scratch_shapes=[pltpu.VMEM((tt, h), jnp.float32)],
        ),
        compiler_params=pltpu.CompilerParams(
            dimension_semantics=("parallel", "arbitrary"),
            vmem_limit_bytes=_vmem_limit(footprint, ceiling)),
    )(x, residual, w2d)


# ----------------------------------------------------------------------------
# Reference (pure JAX) helpers for verification
# ----------------------------------------------------------------------------
def _ref_allreduce(x):
    return jnp.sum(x.astype(jnp.float32), axis=0).astype(x.dtype)


def _ref_rmsnorm(x, residual, w, eps):
    resid = jnp.sum(x.astype(jnp.float32), axis=0) + residual.astype(jnp.float32)
    inv = jax.lax.rsqrt(jnp.mean(resid * resid, axis=-1, keepdims=True) + eps)
    return (resid * inv * w.astype(jnp.float32)).astype(x.dtype), resid.astype(x.dtype)


# ----------------------------------------------------------------------------
# Main
# ----------------------------------------------------------------------------
if __name__ == "__main__":
    key = jax.random.PRNGKey(0)
    eps = 1e-6
    k1, k2, k3, k4, k5, k6 = jax.random.split(key, 6)

    # --- case 1: rank-collapsed path (tp <= 4), lane-aligned hidden ----------
    tp, tokens, hidden = 4, 8, 128
    x = jax.random.normal(k1, (tp, tokens, hidden), dtype=jnp.float32)
    residual = jax.random.normal(k2, (tokens, hidden), dtype=jnp.float32)
    w = jax.random.normal(k3, (hidden,), dtype=jnp.float32)

    out = allreduce_none(x)
    norm, resid = allreduce_residual_rmsnorm(x, residual, w, eps=eps)
    jax.block_until_ready((out, norm, resid))
    ref_norm, ref_resid = _ref_rmsnorm(x, residual, w, eps)
    assert jnp.allclose(out, _ref_allreduce(x), atol=1e-5, rtol=1e-5)
    assert jnp.allclose(resid, ref_resid, atol=1e-5, rtol=1e-5)
    assert jnp.allclose(norm, ref_norm, atol=1e-4, rtol=1e-4)

    # --- case 2: non-lane-aligned hidden (h % 128 != 0 -> masked lane stores)
    tp2, tok2, hid2 = 2, 16, 96
    x2 = jax.random.normal(k4, (tp2, tok2, hid2), dtype=jnp.float32)
    res2 = jax.random.normal(k5, (tok2, hid2), dtype=jnp.float32)
    w2 = jax.random.normal(k6, (hid2,), dtype=jnp.float32)
    out2 = allreduce_none(x2)
    norm2, resid2 = allreduce_residual_rmsnorm(x2, res2, w2, eps=eps)
    jax.block_until_ready((out2, norm2, resid2))
    ref_norm2, ref_resid2 = _ref_rmsnorm(x2, res2, w2, eps)
    assert jnp.allclose(out2, _ref_allreduce(x2), atol=1e-5, rtol=1e-5)
    assert jnp.allclose(resid2, ref_resid2, atol=1e-5, rtol=1e-5)
    assert jnp.allclose(norm2, ref_norm2, atol=1e-4, rtol=1e-4)

    # --- case 3: per-rank streaming path (tp > 4), f32 (in-place / f32 acc) --
    tp3, tok3, hid3 = 8, 16, 128
    x3 = jax.random.normal(k1, (tp3, tok3, hid3), dtype=jnp.float32)
    res3 = jax.random.normal(k2, (tok3, hid3), dtype=jnp.float32)
    w3 = jax.random.normal(k3, (hid3,), dtype=jnp.float32)
    out3 = allreduce_none(x3)
    norm3, resid3 = allreduce_residual_rmsnorm(x3, res3, w3, eps=eps)
    jax.block_until_ready((out3, norm3, resid3))
    ref_norm3, ref_resid3 = _ref_rmsnorm(x3, res3, w3, eps)
    assert jnp.allclose(out3, _ref_allreduce(x3), atol=1e-5, rtol=1e-5)
    assert jnp.allclose(resid3, ref_resid3, atol=1e-5, rtol=1e-5)
    assert jnp.allclose(norm3, ref_norm3, atol=1e-4, rtol=1e-4)

    # --- case 4: per-rank streaming path, bf16 I/O with f32 scratch ----------
    x4 = jax.random.normal(k4, (8, 16, 128), dtype=jnp.bfloat16)
    out4 = allreduce_none(x4)
    jax.block_until_ready(out4)
    ref4 = _ref_allreduce(x4)
    assert jnp.allclose(out4.astype(jnp.float32), ref4.astype(jnp.float32),
                        atol=1e-1, rtol=2e-2)

    print("KERNEL_OK")
</pallas_src>

<mosaic_0001>
module attributes {stable_mosaic.version = 11 : i64} {
  func.func @_sum_collapsed_kernel(%arg0: i32, %arg1: memref<4x8x128xf32, #tpu.memory_space<vmem>>, %arg2: memref<8x128xf32, #tpu.memory_space<vmem>>) attributes {dimension_semantics = [#tpu.dimension_semantics<parallel>], iteration_bounds = array<i64: 1>, scalar_prefetch = 0 : i64, scratch_operands = 0 : i64, tpu.core_type = #tpu.core_type<tc>, window_params = [{transform_indices = @transform_0, window_bounds = array<i64: 4, 8, 128>}, {transform_indices = @transform_1, window_bounds = array<i64: 8, 128>}]} {
    %c0 = arith.constant 0 : index
    %c0_0 = arith.constant 0 : index
    %c0_1 = arith.constant 0 : index
    %0 = vector.load %arg1[%c0, %c0_0, %c0_1] : memref<4x8x128xf32, #tpu.memory_space<vmem>>, vector<1x8x128xf32>
    %1 = vector.shape_cast %0 : vector<1x8x128xf32> to vector<8x128xf32>
    %c1 = arith.constant 1 : index
    %c0_2 = arith.constant 0 : index
    %c0_3 = arith.constant 0 : index
    %2 = vector.load %arg1[%c1, %c0_2, %c0_3] : memref<4x8x128xf32, #tpu.memory_space<vmem>>, vector<1x8x128xf32>
    %3 = vector.shape_cast %2 : vector<1x8x128xf32> to vector<8x128xf32>
    %4 = arith.addf %1, %3 : vector<8x128xf32>
    %c2 = arith.constant 2 : index
    %c0_4 = arith.constant 0 : index
    %c0_5 = arith.constant 0 : index
    %5 = vector.load %arg1[%c2, %c0_4, %c0_5] : memref<4x8x128xf32, #tpu.memory_space<vmem>>, vector<1x8x128xf32>
    %6 = vector.shape_cast %5 : vector<1x8x128xf32> to vector<8x128xf32>
    %7 = arith.addf %4, %6 : vector<8x128xf32>
    %c3 = arith.constant 3 : index
    %c0_6 = arith.constant 0 : index
    %c0_7 = arith.constant 0 : index
    %8 = vector.load %arg1[%c3, %c0_6, %c0_7] : memref<4x8x128xf32, #tpu.memory_space<vmem>>, vector<1x8x128xf32>
    %9 = vector.shape_cast %8 : vector<1x8x128xf32> to vector<8x128xf32>
    %10 = arith.addf %7, %9 : vector<8x128xf32>
    %c0_8 = arith.constant 0 : index
    %c0_9 = arith.constant 0 : index
    %11 = vector.load %arg2[%c0_8, %c0_9] : memref<8x128xf32, #tpu.memory_space<vmem>>, vector<8x128xf32>
    tpu.vector_store %arg2[%c0_8, %c0_9], %10 {strides = array<i32>} : memref<8x128xf32, #tpu.memory_space<vmem>>, vector<8x128xf32>,
    return
  }
  func.func @transform_0(%arg0: i32) -> (i32, i32, i32) {
    %c0_i32 = arith.constant 0 : i32
    %c0_i32_0 = arith.constant 0 : i32
    %c0_i32_1 = arith.constant 0 : i32
    return %c0_i32, %arg0, %c0_i32_0 : i32, i32, i32
  }
  func.func @transform_1(%arg0: i32) -> (i32, i32) {
    %c0_i32 = arith.constant 0 : i32
    %c0_i32_0 = arith.constant 0 : i32
    return %arg0, %c0_i32 : i32, i32
  }
}

</mosaic_0001>

<llo_original>
// kernel: allreduce_none.1
$region0: #{allreduce_none.1}
  #allocation0 [shape = 'u32[]', space=smem, size = 0x4, offset = 0x4, fixed_abs, tag = 'smem constant byte address 0x4 - core index']
  #allocation1 [shape = 'u32[144,128]{1,0:T(1,128)}', space=vmem, size = 0x12000, scoped, tag = 'internal scratch']
  %s0 = inlined_call_operand.hbm [shape: f32[4,8,128], index: 0, kind: input, shape index: {}]
  %s1 = inlined_call_operand.hbm [shape: f32[8,128], index: 1, kind: output, shape index: {}]
  %s2 = sld [smem:[#allocation0]]
  $region18: #{allreduce_none.1} parent=0
    _
  %s4 = ssub.s32 1, %s2
  %s5 = scalar_select 0, %s4, %s2
  $region1: #{allreduce_none.1} parent=0
    #allocation2 [shape = 'u8[16384]{0}', space=vmem, size = 0x4000, scoped, tag = 'input window, operand 0, single buffered']
    #allocation3 [shape = 's32[1]{0}', space=sflag, size = 0x4, scoped, tag = 'scoped memory for allreduce_none.1']
    #allocation4 [shape = 's32[1]{0}', space=sflag, size = 0x4, scoped, tag = 'scoped memory for allreduce_none.1']
    #allocation5 [shape = 'u8[4096]{0}', space=vmem, size = 0x1000, scoped, tag = 'output window, operand 0, single buffered']
    %6 = vsyncpa [#allocation3], 0
    %7 = vsyncpa [#allocation4], 0
    // Predicated region
    $region2: #{allreduce_none.1} parent=1 // pred_check
      _
    $region3: #{allreduce_none.1} parent=1 // pred_check_branch
      %9 = sbr.rel (0) target = $region5
    $region4: #{allreduce_none.1} parent=1 // pred_region
      %s11 = ssub.s32 512, 512
      %12 = vsyncadd [#allocation3], %s11
      %s13 = sshll.u32 [#allocation2], 4
      %s14 = int_to_ptr.vmem [resolvable:$true] %s13
      %19 = dma.hbm_to_vmem [thread:$0]  %s0, 512, %s14, [#allocation3], 128, 128, 8
    $region5: #{allreduce_none.1} parent=1 // pred_fallthru
      _
    // Predicated region
    $region6: #{allreduce_none.1} parent=1 // pred_check
      _
    $region7: #{allreduce_none.1} parent=1 // pred_check_branch
      %21 = sbr.rel (0) target = $region9
    $region8: #{allreduce_none.1} parent=1 // pred_region
      %22 = dma.done [#allocation3], 512
    $region9: #{allreduce_none.1} parent=1 // pred_fallthru
      _
    %v23 = vld [vmem:[#allocation2] sm:$0xff]
    %s24 = scalar_lea.vmem [#allocation2], 8
    %v25 = vld [vmem:[%s24] sm:$0xff]
    %v26 = vadd.f32 %v23, %v25
    %s27 = scalar_lea.vmem [#allocation2], 16
    %v28 = vld [vmem:[%s27] sm:$0xff]
    %v29 = vadd.f32 %v26, %v28
    %s30 = scalar_lea.vmem [#allocation2], 24
    %v31 = vld [vmem:[%s30] sm:$0xff]
    %v32 = vadd.f32 %v29, %v31
    %33 = vst [vmem:[#allocation5] sm:$0xff] %v32
    // Predicated region
    $region10: #{allreduce_none.1} parent=1 // pred_check
      _
    $region11: #{allreduce_none.1} parent=1 // pred_check_branch
      %35 = sbr.rel (0) target = $region13
    $region12: #{allreduce_none.1} parent=1 // pred_region
      %s37 = ssub.s32 128, 128
      %38 = vsyncadd [#allocation4], %s37
      %s40 = sshll.u32 [#allocation5], 4
      %s41 = int_to_ptr.vmem [resolvable:$true] %s40
      %43 = dma.vmem_to_hbm [thread:$0]  %s41, 128, %s1, [#allocation4]
    $region13: #{allreduce_none.1} parent=1 // pred_fallthru
      _
    // Predicated region
    $region14: #{allreduce_none.1} parent=1 // pred_check
      _
    $region15: #{allreduce_none.1} parent=1 // pred_check_branch
      %45 = sbr.rel (0) target = $region17
    $region16: #{allreduce_none.1} parent=1 // pred_region
      %46 = dma.done [#allocation4], 128
    $region17: #{allreduce_none.1} parent=1 // pred_fallthru
      _
    %47 = vsyncpa [#allocation3], 1
    %48 = vsyncpa [#allocation4], 1

</llo_original>
